<compile_context>
chip_gen: v7x
topology: tpu7x:2x2x1
jax: 0.10.0
libtpu: 0.0.40
codegen_flags: <defaults>
</compile_context>

<pallas_src>
import jax
import jax.numpy as jnp
from jax.experimental import pallas as pl
from jax.experimental.pallas import tpu as pltpu


# --------------------------------------------------------------------------
# Kernel 1: hoisted input projection  gates_x = x @ W_ih + b   (parallel)
# --------------------------------------------------------------------------
def _input_proj_kernel(x_ref, wih_ref, b_ref, gx_ref):
    # x_ref: (TT*B, E) bf16, wih_ref: (E, 4H) bf16, b_ref: (1, 4H) f32
    gx_ref[...] = (jnp.dot(x_ref[...], wih_ref[...],
                           preferred_element_type=jnp.float32)
                   + b_ref[...])


# --------------------------------------------------------------------------
# Kernel 2: time recurrence (TT timesteps per grid step, batch-parallel)
# --------------------------------------------------------------------------
def _lstm_recurrence_kernel(gx_ref, m_ref, whh_ref, we2d_ref, be2d_ref,
                            ctx_ref, ct_ref, dec_ref, h_sc, c_sc):
    t_blk = pl.program_id(1)
    n_t = pl.num_programs(1)
    TT = gx_ref.shape[0]
    H = h_sc.shape[-1]

    @pl.when(t_blk == 0)
    def _():
        h_sc[...] = jnp.zeros_like(h_sc)
        c_sc[...] = jnp.zeros_like(c_sc)

    whh = whh_ref[...]  # (H, 4H) bf16, loaded once per time block

    def step(tt, carry):
        h_prev, c_prev = carry                         # (TB, H) f32
        # per-step MXU work is only h_prev @ W_hh; x-projection is precomputed
        gates = gx_ref[tt] + jnp.dot(h_prev.astype(jnp.bfloat16), whh,
                                     preferred_element_type=jnp.float32)
        i = jax.nn.sigmoid(gates[:, 0 * H:1 * H])
        f = jax.nn.sigmoid(gates[:, 1 * H:2 * H])
        g = jnp.tanh(gates[:, 2 * H:3 * H])
        o = jax.nn.sigmoid(gates[:, 3 * H:4 * H])
        c_new = f * c_prev + i * g
        h_new = o * jnp.tanh(c_new)

        m = m_ref[tt]                                  # (TB, 1) f32 validity
        c_upd = c_prev + m * (c_new - c_prev)          # hold state past length
        h_upd = h_prev + m * (h_new - h_prev)
        ctx_ref[tt] = m * h_new                        # zero-padded ctx
        return h_upd, c_upd

    h_fin, c_fin = jax.lax.fori_loop(0, TT, step, (h_sc[...], c_sc[...]),
                                     unroll=True)
    h_sc[...] = h_fin
    c_sc[...] = c_fin

    @pl.when(t_blk == n_t - 1)
    def _():
        ct_ref[...] = c_fin
        dec_ref[...] = jnp.tanh(
            jnp.dot(h_fin.astype(jnp.bfloat16), we2d_ref[...],
                    preferred_element_type=jnp.float32) + be2d_ref[...])


# --------------------------------------------------------------------------
# Wrapper
# --------------------------------------------------------------------------
def encoder_lstm_forward(inputs, lengths, params, *, tt=8, tb=8):
    """inputs: (B, T) int32 vocab ids; lengths: (B,) int32 (descending)."""
    emb_table = params["embedding"]                       # (V, E) f32
    B, T = inputs.shape
    E = emb_table.shape[1]
    H = params["w_hh"].shape[0]
    G = 4 * H
    assert T % tt == 0 and B % tb == 0, "T, B must be divisible by tt, tb"

    # embedding lookup + eval-mode dropout (identity), done in XLA
    embeds = jnp.take(emb_table, inputs, axis=0)           # (B, T, E) f32
    x_flat = (jnp.transpose(embeds, (1, 0, 2))              # (T, B, E)
              .reshape(T * B, E).astype(jnp.bfloat16))      # (T*B, E) bf16

    w_ih = params["w_ih"].astype(jnp.bfloat16)               # (E, 4H)
    w_hh = params["w_hh"].astype(jnp.bfloat16)               # (H, 4H)
    w_e2d = params["w_e2d"].astype(jnp.bfloat16)             # (H, H)
    b = params["b"].astype(jnp.float32)                      # (1, 4H)
    b_e2d = params["b_e2d"].astype(jnp.float32)              # (1, H)

    # ---- 1) hoisted input projection: one big MXU-friendly matmul ----
    rows = tt * B
    gx_flat = pl.pallas_call(
        _input_proj_kernel,
        out_shape=jax.ShapeDtypeStruct((T * B, G), jnp.float32),
        grid_spec=pltpu.PrefetchScalarGridSpec(
            num_scalar_prefetch=0,
            grid=(T // tt,),
            in_specs=[
                pl.BlockSpec((rows, E), lambda i: (i, 0)),   # x rows
                pl.BlockSpec((E, G), lambda i: (0, 0)),      # W_ih
                pl.BlockSpec((1, G), lambda i: (0, 0)),      # b_ih + b_hh
            ],
            out_specs=pl.BlockSpec((rows, G), lambda i: (i, 0)),
        ),
        compiler_params=pltpu.CompilerParams(
            dimension_semantics=("parallel",)),
    )(x_flat, w_ih, b)
    gates_x = gx_flat.reshape(T, B, G)                        # (T, B, 4H) f32

    # per-timestep validity mask, precomputed off the critical path
    mask = (jnp.arange(T, dtype=jnp.int32)[:, None]
            < lengths.astype(jnp.int32)[None, :]).astype(jnp.float32)
    mask = mask.reshape(T, B, 1)                              # (T, B, 1)

    # ---- 2) recurrence: batch-parallel outer axis, serial time axis last ----
    ctx_tbh, c_t, dec_init = pl.pallas_call(
        _lstm_recurrence_kernel,
        out_shape=(
            jax.ShapeDtypeStruct((T, B, H), jnp.float32),     # ctx (time-major)
            jax.ShapeDtypeStruct((B, H), jnp.float32),        # c_t
            jax.ShapeDtypeStruct((B, H), jnp.float32),        # decoder_init
        ),
        grid_spec=pltpu.PrefetchScalarGridSpec(
            num_scalar_prefetch=0,
            grid=(B // tb, T // tt),
            in_specs=[
                pl.BlockSpec((tt, tb, G), lambda bi, ti: (ti, bi, 0)),  # gates_x
                pl.BlockSpec((tt, tb, 1), lambda bi, ti: (ti, bi, 0)),  # mask
                pl.BlockSpec((H, G), lambda bi, ti: (0, 0)),            # W_hh
                pl.BlockSpec((H, H), lambda bi, ti: (0, 0)),            # W_e2d
                pl.BlockSpec((1, H), lambda bi, ti: (0, 0)),            # b_e2d
            ],
            out_specs=[
                pl.BlockSpec((tt, tb, H), lambda bi, ti: (ti, bi, 0)),  # ctx
                pl.BlockSpec((tb, H), lambda bi, ti: (bi, 0)),          # c_t
                pl.BlockSpec((tb, H), lambda bi, ti: (bi, 0)),          # dec init
            ],
            scratch_shapes=[pltpu.VMEM((tb, H), jnp.float32),           # h state
                            pltpu.VMEM((tb, H), jnp.float32)],          # c state
        ),
        compiler_params=pltpu.CompilerParams(
            dimension_semantics=("parallel", "arbitrary")),
    )(gates_x, mask, w_hh, w_e2d, b_e2d)

    ctx = jnp.transpose(ctx_tbh, (1, 0, 2))                   # (B, T, H)
    return ctx, dec_init, c_t


def make_params(key, vocab_size, embedding_size, hidden_size, padding_idx):
    ks = jax.random.split(key, 6)
    scale = 0.1
    emb = scale * jax.random.normal(ks[0], (vocab_size, embedding_size), jnp.float32)
    emb = emb.at[padding_idx].set(0.0)                # nn.Embedding padding_idx row
    w_ih = scale * jax.random.normal(ks[1], (embedding_size, 4 * hidden_size), jnp.float32)
    w_hh = scale * jax.random.normal(ks[2], (hidden_size, 4 * hidden_size), jnp.float32)
    b = scale * jax.random.normal(ks[3], (1, 4 * hidden_size), jnp.float32)   # b_ih + b_hh
    w_e2d = scale * jax.random.normal(ks[4], (hidden_size, hidden_size), jnp.float32)
    b_e2d = scale * jax.random.normal(ks[5], (1, hidden_size), jnp.float32)
    return {"embedding": emb, "w_ih": w_ih, "w_hh": w_hh, "b": b,
            "w_e2d": w_e2d, "b_e2d": b_e2d}


if __name__ == "__main__":
    # lane/sublane-friendly small shapes: H and E multiples of 128, B mult of 8
    vocab_size, embedding_size, hidden_size = 32, 128, 128
    padding_idx = 0
    B, T = 16, 16

    key = jax.random.PRNGKey(0)
    pkey, ikey = jax.random.split(key)
    params = make_params(pkey, vocab_size, embedding_size, hidden_size, padding_idx)

    # lengths must be descending (pack_padded_sequence requirement)
    lengths = jnp.arange(T, T - B, -1, dtype=jnp.int32)       # 16, 15, ..., 1
    inputs = jax.random.randint(ikey, (B, T), 1, vocab_size, dtype=jnp.int32)
    # zero (padding_idx) out the padded tail of each sequence
    pos = jnp.arange(T)[None, :]
    inputs = jnp.where(pos < lengths[:, None], inputs, padding_idx)

    # TODO(synk): dropout is eval-mode identity (no RNG dropout in the kernel).
    ctx, decoder_init, c_t = encoder_lstm_forward(inputs, lengths, params,
                                                  tt=8, tb=8)
    jax.block_until_ready((ctx, decoder_init, c_t))

    assert ctx.shape == (B, T, hidden_size)
    assert decoder_init.shape == (B, hidden_size)
    assert c_t.shape == (B, hidden_size)
    print("KERNEL_OK")
</pallas_src>

<mosaic_0001>
module attributes {stable_mosaic.version = 11 : i64} {
  func.func @_input_proj_kernel(%arg0: i32, %arg1: memref<128x128xbf16, #tpu.memory_space<vmem>>, %arg2: memref<128x512xbf16, #tpu.memory_space<vmem>>, %arg3: memref<1x512xf32, #tpu.memory_space<vmem>>, %arg4: memref<128x512xf32, #tpu.memory_space<vmem>>) attributes {dimension_semantics = [#tpu.dimension_semantics<parallel>], iteration_bounds = array<i64: 2>, scalar_prefetch = 0 : i64, scratch_operands = 0 : i64, tpu.core_type = #tpu.core_type<tc>, window_params = [{transform_indices = @transform_0, window_bounds = array<i64: 128, 128>}, {pipeline_mode = #tpu.pipeline_mode<synchronous>, transform_indices = @transform_1, window_bounds = array<i64: 128, 512>}, {pipeline_mode = #tpu.pipeline_mode<synchronous>, transform_indices = @transform_2, window_bounds = array<i64: 1, 512>}, {transform_indices = @transform_3, window_bounds = array<i64: 128, 512>}]} {
    %c0 = arith.constant 0 : index
    %c0_0 = arith.constant 0 : index
    %0 = vector.load %arg1[%c0, %c0_0] : memref<128x128xbf16, #tpu.memory_space<vmem>>, vector<128x128xbf16>
    %c0_1 = arith.constant 0 : index
    %c0_2 = arith.constant 0 : index
    %1 = vector.load %arg2[%c0_1, %c0_2] : memref<128x512xbf16, #tpu.memory_space<vmem>>, vector<128x512xbf16>
    %cst = arith.constant dense<0.000000e+00> : vector<128x512xf32>
    %2 = tpu.matmul %0, %1, %cst {dimension_numbers = #tpu.dot_dimension_numbers<[1], [0], [0], [1], [0, 0, 1, 1], [], []>} : vector<128x128xbf16>, vector<128x512xbf16>, vector<128x512xf32> -> vector<128x512xf32>
    %c0_3 = arith.constant 0 : index
    %c0_4 = arith.constant 0 : index
    %3 = vector.load %arg3[%c0_3, %c0_4] : memref<1x512xf32, #tpu.memory_space<vmem>>, vector<1x512xf32>
    %4 = vector.broadcast %3 : vector<1x512xf32> to vector<128x512xf32>
    %5 = arith.addf %2, %4 : vector<128x512xf32>
    %c0_5 = arith.constant 0 : index
    %c0_6 = arith.constant 0 : index
    %6 = vector.load %arg4[%c0_5, %c0_6] : memref<128x512xf32, #tpu.memory_space<vmem>>, vector<128x512xf32>
    tpu.vector_store %arg4[%c0_5, %c0_6], %5 {strides = array<i32>} : memref<128x512xf32, #tpu.memory_space<vmem>>, vector<128x512xf32>,
    return
  }
  func.func @transform_0(%arg0: i32) -> (i32, i32) {
    %c0_i32 = arith.constant 0 : i32
    %c0_i32_0 = arith.constant 0 : i32
    return %arg0, %c0_i32 : i32, i32
  }
  func.func @transform_1(%arg0: i32) -> (i32, i32) {
    %c0_i32 = arith.constant 0 : i32
    %c0_i32_0 = arith.constant 0 : i32
    %c0_i32_1 = arith.constant 0 : i32
    return %c0_i32, %c0_i32_0 : i32, i32
  }
  func.func @transform_2(%arg0: i32) -> (i32, i32) {
    %c0_i32 = arith.constant 0 : i32
    %c0_i32_0 = arith.constant 0 : i32
    %c0_i32_1 = arith.constant 0 : i32
    return %c0_i32, %c0_i32_0 : i32, i32
  }
  func.func @transform_3(%arg0: i32) -> (i32, i32) {
    %c0_i32 = arith.constant 0 : i32
    %c0_i32_0 = arith.constant 0 : i32
    return %arg0, %c0_i32 : i32, i32
  }
}

</mosaic_0001>

<llo_original>
// kernel: tpu_custom_call.1
$region0: #{tpu_custom_call.1}
  #allocation0 [shape = 'u32[]', space=smem, size = 0x4, offset = 0x4, fixed_abs, tag = 'smem constant byte address 0x4 - core index']
  #allocation1 [shape = 'u32[144,128]{1,0:T(1,128)}', space=vmem, size = 0x12000, scoped, tag = 'internal scratch']
  %s0 = inlined_call_operand.hbm [shape: bf16[256,128], index: 0, kind: input, shape index: {}]
  %s1 = inlined_call_operand.hbm [shape: bf16[128,512], index: 1, kind: input, shape index: {}]
  %s2 = inlined_call_operand.vmem [shape: f32[1,512], index: 2, kind: input, shape index: {}]
  %s3 = inlined_call_operand.hbm [shape: f32[256,512], index: 3, kind: output, shape index: {}]
  %s4 = sld [smem:[#allocation0]]
  $region53: #{tpu_custom_call.1} parent=0
    _
  %s6 = ssub.s32 1, %s4
  %s7 = scalar_select 0, %s6, %s4
  $region1: #{tpu_custom_call.1} parent=0
    #allocation2 [shape = 'u8[65536]{0}', space=vmem, size = 0x10000, scoped, tag = 'input window, operand 0']
    #allocation3 [shape = 's32[2]{0}', space=sflag, size = 0x8, scoped, tag = 'scoped memory for tpu_custom_call.1']
    #allocation4 [shape = 's32[2]{0}', space=sflag, size = 0x8, scoped, tag = 'scoped memory for tpu_custom_call.1']
    #allocation5 [shape = 'u8[131072]{0}', space=vmem, size = 0x20000, scoped, tag = 'input window, operand 1, single buffered']
    #allocation6 [shape = 's32[1]{0}', space=sflag, size = 0x4, scoped, tag = 'scoped memory for tpu_custom_call.1']
    #allocation7 [shape = 'u8[524288]{0}', space=vmem, size = 0x80000, scoped, tag = 'output window, operand 0']
    %8 = vsyncpa [#allocation3], 0
    %s9 = scalar_lea.sflag [#allocation3], 1
    %10 = vsyncpa %s9, 0
    %11 = vsyncpa [#allocation6], 0
    %12 = vsyncpa [#allocation4], 0
    %s13 = scalar_lea.sflag [#allocation4], 1
    %14 = vsyncpa %s13, 0
    loop: start=0, step=1, limit=4
    $region2: #{tpu_custom_call.1} parent=1 // loop_pre_header
      _
    $region3: #{tpu_custom_call.1} parent=1 // loop_header
      %s16 = sphi 0, %s20
      %p17 = scmp.ge.s32.totalorder %s16, 4
      %s26 = sphi 0, %s28
      %s29 = sphi 0, %s26
      %s30 = sphi 0, %s29
      %s46 = sphi 0, %s30
      %s50 = sphi 0, %s50
      %s52 = sphi 0, %s50
      %s53 = sphi 0, %s52
      %s67 = sphi 0, %s53
      %s71 = sphi 0, %s71
      %s73 = sphi 0, %s71
      %s74 = sphi 0, %s73
      %s88 = sphi 0, %s74
      %s94 = sphi 0, %s96
      %s97 = sphi 0, %s94
      %s98 = sphi 0, %s97
      %s114 = sphi 0, %s98
    $region4: #{tpu_custom_call.1} parent=1 // loop_header_branch
      %19 = sbr.rel (%p17) target = $region8
    $region5: #{tpu_custom_call.1} parent=1 // loop_body
      %s21 = ssub.s32 %s16, 1
      %s22 = ssub.s32 %s16, 2
      %s23 = sadd.s32 %s16, 1
      %s24 = ssub.s32 %s16, %s23
      %p25 = scmp.eq.s32.totalorder %s24, 0
      %s27 = sadd.s32 %s26, 1
      %s28 = scalar_select %p25, %s26, %s27
      %p31 = pneg %p25
      %p32 = scmp.eq.s32.totalorder %s16, 1
      %p33 = por %p31, %p32
      %p34 = scmp.ne.s32.totalorder %s26, %s29
      %p35 = scmp.eq.s32.totalorder %s16, 0
      %p36 = por %p34, %p35
      %p37 = scmp.ne.s32.totalorder %s26, %s29
      %p38 = scmp.eq.s32.totalorder %s21, 1
      %p39 = por %p37, %p38
      %p40 = scmp.ne.s32.totalorder %s29, %s30
      %p41 = scmp.eq.s32.totalorder %s21, 0
      %p42 = por %p40, %p41
      %p43 = scmp.ne.s32.totalorder %s29, %s30
      %p44 = scmp.eq.s32.totalorder %s22, 1
      %p45 = por %p43, %p44
      %p47 = scmp.ne.s32.totalorder %s30, %s46
      %p48 = scmp.eq.s32.totalorder %s22, 0
      %p49 = por %p47, %p48
      %s51 = sadd.s32 %s50, 1
      %p54 = scmp.eq.s32.totalorder %s16, 1
      %p55 = scmp.ne.s32.totalorder %s50, %s52
      %p56 = scmp.eq.s32.totalorder %s16, 0
      %p57 = por %p55, %p56
      %p58 = scmp.ne.s32.totalorder %s50, %s52
      %p59 = scmp.eq.s32.totalorder %s21, 1
      %p60 = por %p58, %p59
      %p61 = scmp.ne.s32.totalorder %s52, %s53
      %p62 = scmp.eq.s32.totalorder %s21, 0
      %p63 = por %p61, %p62
      %p64 = scmp.ne.s32.totalorder %s52, %s53
      %p65 = scmp.eq.s32.totalorder %s22, 1
      %p66 = por %p64, %p65
      %p68 = scmp.ne.s32.totalorder %s53, %s67
      %p69 = scmp.eq.s32.totalorder %s22, 0
      %p70 = por %p68, %p69
      %s72 = sadd.s32 %s71, 1
      %p75 = scmp.eq.s32.totalorder %s16, 1
      %p76 = scmp.ne.s32.totalorder %s71, %s73
      %p77 = scmp.eq.s32.totalorder %s16, 0
      %p78 = por %p76, %p77
      %p79 = scmp.ne.s32.totalorder %s71, %s73
      %p80 = scmp.eq.s32.totalorder %s21, 1
      %p81 = por %p79, %p80
      %p82 = scmp.ne.s32.totalorder %s73, %s74
      %p83 = scmp.eq.s32.totalorder %s21, 0
      %p84 = por %p82, %p83
      %p85 = scmp.ne.s32.totalorder %s73, %s74
      %p86 = scmp.eq.s32.totalorder %s22, 1
      %p87 = por %p85, %p86
      %p89 = scmp.ne.s32.totalorder %s74, %s88
      %p90 = scmp.eq.s32.totalorder %s22, 0
      %p91 = por %p89, %p90
      %s92 = ssub.s32 %s16, %s23
      %p93 = scmp.eq.s32.totalorder %s92, 0
      %s95 = sadd.s32 %s94, 1
      %s96 = scalar_select %p93, %s94, %s95
      %p99 = pneg %p93
      %p100 = scmp.eq.s32.totalorder %s16, 1
      %p101 = por %p99, %p100
      %p102 = scmp.ne.s32.totalorder %s94, %s97
      %p103 = scmp.eq.s32.totalorder %s16, 0
      %p104 = por %p102, %p103
      %p105 = scmp.ne.s32.totalorder %s94, %s97
      %p106 = scmp.eq.s32.totalorder %s21, 1
      %p107 = por %p105, %p106
      %p108 = scmp.ne.s32.totalorder %s97, %s98
      %p109 = scmp.eq.s32.totalorder %s21, 0
      %p110 = por %p108, %p109
      %p111 = scmp.ne.s32.totalorder %s97, %s98
      %p112 = scmp.eq.s32.totalorder %s22, 1
      %p113 = por %p111, %p112
      %p115 = scmp.ne.s32.totalorder %s98, %s114
      %p116 = scmp.eq.s32.totalorder %s22, 0
      %p117 = por %p115, %p116
      %p118 = scmp.le.s32.totalorder 1, %s16
      %p119 = scmp.lt.s32.totalorder %s16, 3
      %p120 = pnand %p118, %p119
      %p121 = pneg %p120
      // Predicated region
      $region9: #{tpu_custom_call.1} parent=5 // pred_check
        _
      $region10: #{tpu_custom_call.1} parent=5 // pred_check_branch
        %123 = sbr.rel (%p120) target = $region12
      $region11: #{tpu_custom_call.1} parent=5 // pred_region
        %s124 = ssub.s32 %s16, 1
        // Predicated region
        $region13: #{tpu_custom_call.1} parent=11 // pred_check
          %p125 = pneg %p63
        $region14: #{tpu_custom_call.1} parent=11 // pred_check_branch
          %127 = sbr.rel (%p125) target = $region16
        $region15: #{tpu_custom_call.1} parent=11 // pred_region
          %s129 = ssub.s32 4096, 4096
          %130 = vsyncadd [#allocation6], %s129
          %s131 = sshll.u32 [#allocation5], 4
          %s132 = int_to_ptr.vmem [resolvable:$true] %s131
          %137 = dma.hbm_to_vmem [thread:$0]  %s1, 4096, %s132, [#allocation6], 256, 256, 16
        $region16: #{tpu_custom_call.1} parent=11 // pred_fallthru
          _
        // Predicated region
        $region17: #{tpu_custom_call.1} parent=11 // pred_check
          %p138 = pneg %p84
        $region18: #{tpu_custom_call.1} parent=11 // pred_check_branch
          %140 = sbr.rel (%p138) target = $region20
        $region19: #{tpu_custom_call.1} parent=11 // pred_region
          _
        $region20: #{tpu_custom_call.1} parent=11 // pred_fallthru
          _
      $region12: #{tpu_custom_call.1} parent=5 // pred_fallthru
        _
      %p141 = scmp.lt.s32.totalorder %s16, 2
      // Predicated region
      $region21: #{tpu_custom_call.1} parent=5 // pred_check
        %p142 = pneg %p141
      $region22: #{tpu_custom_call.1} parent=5 // pred_check_branch
        %144 = sbr.rel (%p142) target = $region24
      $region23: #{tpu_custom_call.1} parent=5 // pred_region
        // Predicated region
        $region25: #{tpu_custom_call.1} parent=23 // pred_check
          %p145 = pneg %p36
        $region26: #{tpu_custom_call.1} parent=23 // pred_check_branch
          %147 = sbr.rel (%p145) target = $region28
        $region27: #{tpu_custom_call.1} parent=23 // pred_region
          %s148 = sand.u32 %s26, 1
          %s149 = scalar_lea.sflag [#allocation3], %s148
          %s150 = sand.u32 %s26, 1
          %s151 = smul.addr %s150, 64
          %s152 = scalar_lea.vmem [#allocation2], %s151
          %s153 = smul.u32 16, %s16
          %s155 = ssub.s32 1024, 1024
          %156 = vsyncadd %s149, %s155
          %s157 = smul.addr %s153, 64
          %s158 = scalar_lea.hbm %s0, %s157
          %s159 = sshll.u32 %s152, 4
          %s160 = int_to_ptr.vmem [resolvable:$true] %s159
          %165 = dma.hbm_to_vmem [thread:$0]  %s158, 1024, %s160, %s149, 64, 64, 4
        $region28: #{tpu_custom_call.1} parent=23 // pred_fallthru
          _
      $region24: #{tpu_custom_call.1} parent=5 // pred_fallthru
        _
      %p166 = scmp.le.s32.totalorder 1, %s16
      %p167 = scmp.lt.s32.totalorder %s16, 3
      %p168 = pnand %p166, %p167
      %p169 = pneg %p168
      // Predicated region
      $region29: #{tpu_custom_call.1} parent=5 // pred_check
        _
      $region30: #{tpu_custom_call.1} parent=5 // pred_check_branch
        %171 = sbr.rel (%p168) target = $region32
      $region31: #{tpu_custom_call.1} parent=5 // pred_region
        %s172 = ssub.s32 %s16, 1
        %s173 = sand.u32 %s29, 1
        %s174 = scalar_lea.sflag [#allocation3], %s173
        %s175 = sand.u32 %s29, 1
        %s176 = smul.addr %s175, 64
        %s177 = scalar_lea.vmem [#allocation2], %s176
        // Predicated region
        $region33: #{tpu_custom_call.1} parent=31 // pred_check
          %p178 = pneg %p42
        $region34: #{tpu_custom_call.1} parent=31 // pred_check_branch
          %180 = sbr.rel (%p178) target = $region36
        $region35: #{tpu_custom_call.1} parent=31 // pred_region
          %181 = dma.done %s174, 1024
        $region36: #{tpu_custom_call.1} parent=31 // pred_fallthru
          _
        // Predicated region
        $region37: #{tpu_custom_call.1} parent=31 // pred_check
          %p182 = pneg %p63
        $region38: #{tpu_custom_call.1} parent=31 // pred_check_branch
          %184 = sbr.rel (%p182) target = $region40
        $region39: #{tpu_custom_call.1} parent=31 // pred_region
          %185 = dma.done [#allocation6], 4096
        $region40: #{tpu_custom_call.1} parent=31 // pred_fallthru
          _
        %s186 = sand.u32 %s29, 1
        %s187 = scalar_lea.sflag [#allocation3], %s186
        %s188 = sand.u32 %s29, 1
        %s189 = smul.addr %s188, 64
        %s190 = scalar_lea.vmem [#allocation2], %s189
        %p191 = pneg %p42
        %p192 = pneg %p39
        %p193 = pneg %p63
        %p194 = pneg %p60
        %p195 = pneg %p84
        %p196 = pneg %p81
        %p197 = pneg %p110
        %p198 = pneg %p107
        %s199 = sand.u32 %s97, 1
        %s200 = scalar_lea.sflag [#allocation4], %s199
        %s201 = sand.u32 %s97, 1
        %s202 = smul.addr %s201, 512
        %s203 = scalar_lea.vmem [#allocation7], %s202
        %s204 = smul.u32 16, %s21
        %s205 = smul.u32 16, %s21
        %v207 = vld [vmem:[%s177] sm:$0xf]
        %v208 = vld [vmem:[%s177 + $0x4] sm:$0xf]
        %v209 = vld [vmem:[%s177 + $0x8] sm:$0xf]
        %v210 = vld [vmem:[%s177 + $0xc] sm:$0xf]
        %v211 = vld [vmem:[%s177 + $0x10] sm:$0xf]
        %v212 = vld [vmem:[%s177 + $0x14] sm:$0xf]
        %v213 = vld [vmem:[%s177 + $0x18] sm:$0xf]
        %v214 = vld [vmem:[%s177 + $0x1c] sm:$0xf]
        %v215 = vld [vmem:[%s177 + $0x20] sm:$0xf]
        %v216 = vld [vmem:[%s177 + $0x24] sm:$0xf]
        %v217 = vld [vmem:[%s177 + $0x28] sm:$0xf]
        %v218 = vld [vmem:[%s177 + $0x2c] sm:$0xf]
        %v219 = vld [vmem:[%s177 + $0x30] sm:$0xf]
        %v220 = vld [vmem:[%s177 + $0x34] sm:$0xf]
        %v221 = vld [vmem:[%s177 + $0x38] sm:$0xf]
        %v222 = vld [vmem:[%s177 + $0x3c] sm:$0xf]
        %v223 = vld [vmem:[#allocation5] sm:$0xff]
        %v224 = vld [vmem:[#allocation5 + $0x8] sm:$0xff]
        %v225 = vld [vmem:[#allocation5 + $0x10] sm:$0xff]
        %v226 = vld [vmem:[#allocation5 + $0x18] sm:$0xff]
        %v227 = vld [vmem:[#allocation5 + $0x20] sm:$0xff]
        %v228 = vld [vmem:[#allocation5 + $0x28] sm:$0xff]
        %v229 = vld [vmem:[#allocation5 + $0x30] sm:$0xff]
        %v230 = vld [vmem:[#allocation5 + $0x38] sm:$0xff]
        %v231 = vld [vmem:[#allocation5 + $0x40] sm:$0xff]
        %v232 = vld [vmem:[#allocation5 + $0x48] sm:$0xff]
        %v233 = vld [vmem:[#allocation5 + $0x50] sm:$0xff]
        %v234 = vld [vmem:[#allocation5 + $0x58] sm:$0xff]
        %v235 = vld [vmem:[#allocation5 + $0x60] sm:$0xff]
        %v236 = vld [vmem:[#allocation5 + $0x68] sm:$0xff]
        %v237 = vld [vmem:[#allocation5 + $0x70] sm:$0xff]
        %v238 = vld [vmem:[#allocation5 + $0x78] sm:$0xff]
        %v239 = vld [vmem:[#allocation5 + $0x80] sm:$0xff]
        %v240 = vld [vmem:[#allocation5 + $0x88] sm:$0xff]
        %v241 = vld [vmem:[#allocation5 + $0x90] sm:$0xff]
        %v242 = vld [vmem:[#allocation5 + $0x98] sm:$0xff]
        %v243 = vld [vmem:[#allocation5 + $0xa0] sm:$0xff]
        %v244 = vld [vmem:[#allocation5 + $0xa8] sm:$0xff]
        %v245 = vld [vmem:[#allocation5 + $0xb0] sm:$0xff]
        %v246 = vld [vmem:[#allocation5 + $0xb8] sm:$0xff]
        %v247 = vld [vmem:[#allocation5 + $0xc0] sm:$0xff]
        %v248 = vld [vmem:[#allocation5 + $0xc8] sm:$0xff]
        %v249 = vld [vmem:[#allocation5 + $0xd0] sm:$0xff]
        %v250 = vld [vmem:[#allocation5 + $0xd8] sm:$0xff]
        %v251 = vld [vmem:[#allocation5 + $0xe0] sm:$0xff]
        %v252 = vld [vmem:[#allocation5 + $0xe8] sm:$0xff]
        %v253 = vld [vmem:[#allocation5 + $0xf0] sm:$0xff]
        %v254 = vld [vmem:[#allocation5 + $0xf8] sm:$0xff]
        %v255 = vld [vmem:[%s2] sm:$0xf]
        %v257 = vlaneseq
        %v258 = vshrl.u32 %v257, 7
        %v259 = vsub.s32 0, %v258
        %v260 = vrot.slane %v255, %v259
        %v261 = vlaneseq
        %v262 = vshrl.u32 %v261, 7
        %v263 = vsub.s32 1, %v262
        %v264 = vrot.slane %v255, %v263
        %v265 = vlaneseq
        %v266 = vshrl.u32 %v265, 7
        %v267 = vsub.s32 2, %v266
        %v268 = vrot.slane %v255, %v267
        %v269 = vlaneseq
        %v270 = vshrl.u32 %v269, 7
        %v271 = vsub.s32 3, %v270
        %v272 = vrot.slane %v255, %v271
        %v293 = vunpack.c.l.b16 %v207
        %v294 = vunpack.c.l.b16 %v208
        %v295 = vunpack.c.l.b16 %v209
        %v296 = vunpack.c.l.b16 %v210
        %v297 = vunpack.c.l.b16 %v211
        %v298 = vunpack.c.l.b16 %v212
        %v299 = vunpack.c.l.b16 %v213
        %v300 = vunpack.c.l.b16 %v214
        %v301 = vunpack.c.l.b16 %v215
        %v302 = vunpack.c.l.b16 %v216
        %v303 = vunpack.c.l.b16 %v217
        %v304 = vunpack.c.l.b16 %v218
        %v305 = vunpack.c.l.b16 %v219
        %v306 = vunpack.c.l.b16 %v220
        %v307 = vunpack.c.l.b16 %v221
        %v308 = vunpack.c.l.b16 %v222
        %v309 = vpack.c.b16 %v294, %v293
        %v310 = vpack.c.b16 %v296, %v295
        %v311 = vpack.c.b16 %v298, %v297
        %v312 = vpack.c.b16 %v300, %v299
        %v313 = vpack.c.b16 %v302, %v301
        %v314 = vpack.c.b16 %v304, %v303
        %v315 = vpack.c.b16 %v306, %v305
        %v316 = vpack.c.b16 %v308, %v307
        %v357 = vunpack.c.l.b16 %v223
        %v358 = vunpack.c.h.b16 %v223
        %v359 = vunpack.c.l.b16 %v224
        %v360 = vunpack.c.h.b16 %v224
        %v361 = vunpack.c.l.b16 %v225
        %v362 = vunpack.c.h.b16 %v225
        %v363 = vunpack.c.l.b16 %v226
        %v364 = vunpack.c.h.b16 %v226
        %v365 = vunpack.c.l.b16 %v227
        %v366 = vunpack.c.h.b16 %v227
        %v367 = vunpack.c.l.b16 %v228
        %v368 = vunpack.c.h.b16 %v228
        %v369 = vunpack.c.l.b16 %v229
        %v370 = vunpack.c.h.b16 %v229
        %v371 = vunpack.c.l.b16 %v230
        %v372 = vunpack.c.h.b16 %v230
        %v373 = vunpack.c.l.b16 %v231
        %v374 = vunpack.c.h.b16 %v231
        %v375 = vunpack.c.l.b16 %v232
        %v376 = vunpack.c.h.b16 %v232
        %v377 = vunpack.c.l.b16 %v233
        %v378 = vunpack.c.h.b16 %v233
        %v379 = vunpack.c.l.b16 %v234
        %v380 = vunpack.c.h.b16 %v234
        %v381 = vunpack.c.l.b16 %v235
        %v382 = vunpack.c.h.b16 %v235
        %v383 = vunpack.c.l.b16 %v236
        %v384 = vunpack.c.h.b16 %v236
        %v385 = vunpack.c.l.b16 %v237
        %v386 = vunpack.c.h.b16 %v237
        %v387 = vunpack.c.l.b16 %v238
        %v388 = vunpack.c.h.b16 %v238
        %v389 = vunpack.c.l.b16 %v239
        %v390 = vunpack.c.h.b16 %v239
        %v391 = vunpack.c.l.b16 %v240
        %v392 = vunpack.c.h.b16 %v240
        %v393 = vunpack.c.l.b16 %v241
        %v394 = vunpack.c.h.b16 %v241
        %v395 = vunpack.c.l.b16 %v242
        %v396 = vunpack.c.h.b16 %v242
        %v397 = vunpack.c.l.b16 %v243
        %v398 = vunpack.c.h.b16 %v243
        %v399 = vunpack.c.l.b16 %v244
        %v400 = vunpack.c.h.b16 %v244
        %v401 = vunpack.c.l.b16 %v245
        %v402 = vunpack.c.h.b16 %v245
        %v403 = vunpack.c.l.b16 %v246
        %v404 = vunpack.c.h.b16 %v246
        %v405 = vunpack.c.l.b16 %v247
        %v406 = vunpack.c.h.b16 %v247
        %v407 = vunpack.c.l.b16 %v248
        %v408 = vunpack.c.h.b16 %v248
        %v409 = vunpack.c.l.b16 %v249
        %v410 = vunpack.c.h.b16 %v249
        %v411 = vunpack.c.l.b16 %v250
        %v412 = vunpack.c.h.b16 %v250
        %v413 = vunpack.c.l.b16 %v251
        %v414 = vunpack.c.h.b16 %v251
        %v415 = vunpack.c.l.b16 %v252
        %v416 = vunpack.c.h.b16 %v252
        %v417 = vunpack.c.l.b16 %v253
        %v418 = vunpack.c.h.b16 %v253
        %v419 = vunpack.c.l.b16 %v254
        %v420 = vunpack.c.h.b16 %v254
        %v421 = vpack.c.b16 %v361, %v357
        %v422 = vpack.c.b16 %v362, %v358
        %v423 = vpack.c.b16 %v363, %v359
        %v424 = vpack.c.b16 %v364, %v360
        %v425 = vpack.c.b16 %v369, %v365
        %v426 = vpack.c.b16 %v370, %v366
        %v427 = vpack.c.b16 %v371, %v367
        %v428 = vpack.c.b16 %v372, %v368
        %v429 = vpack.c.b16 %v377, %v373
        %v430 = vpack.c.b16 %v378, %v374
        %v431 = vpack.c.b16 %v379, %v375
        %v432 = vpack.c.b16 %v380, %v376
        %v433 = vpack.c.b16 %v385, %v381
        %v434 = vpack.c.b16 %v386, %v382
        %v435 = vpack.c.b16 %v387, %v383
        %v436 = vpack.c.b16 %v388, %v384
        %v437 = vpack.c.b16 %v393, %v389
        %v438 = vpack.c.b16 %v394, %v390
        %v439 = vpack.c.b16 %v395, %v391
        %v440 = vpack.c.b16 %v396, %v392
        %v441 = vpack.c.b16 %v401, %v397
        %v442 = vpack.c.b16 %v402, %v398
        %v443 = vpack.c.b16 %v403, %v399
        %v444 = vpack.c.b16 %v404, %v400
        %v445 = vpack.c.b16 %v409, %v405
        %v446 = vpack.c.b16 %v410, %v406
        %v447 = vpack.c.b16 %v411, %v407
        %v448 = vpack.c.b16 %v412, %v408
        %v449 = vpack.c.b16 %v417, %v413
        %v450 = vpack.c.b16 %v418, %v414
        %v451 = vpack.c.b16 %v419, %v415
        %v452 = vpack.c.b16 %v420, %v416
        %485 = vmatprep.subr.bf16.mxu0 %v422
        %486 = vmatpush1.bf16.msra.mxu0 %v421
        %487 = vmatprep.subr.bf16.mxu0 %v426
        %488 = vmatpush1.bf16.msra.mxu0 %v425
        %489 = vmatprep.subr.bf16.mxu0 %v430
        %490 = vmatpush1.bf16.msra.mxu0 %v429
        %491 = vmatprep.subr.bf16.mxu0 %v434
        %492 = vmatpush1.bf16.msra.mxu0 %v433
        %493 = vmatprep.subr.bf16.mxu0 %v438
        %494 = vmatpush1.bf16.msra.mxu0 %v437
        %495 = vmatprep.subr.bf16.mxu0 %v442
        %496 = vmatpush1.bf16.msra.mxu0 %v441
        %497 = vmatprep.subr.bf16.mxu0 %v446
        %498 = vmatpush1.bf16.msra.mxu0 %v445
        %499 = vmatprep.subr.bf16.mxu0 %v450
        %500 = vmatpush1.bf16.msra.mxu0 %v449
        %501 = vmatprep.subr.bf16.mxu0 0
        %502 = vmatpush1.bf16.msra.mxu0 0
        %503 = vmatprep.subr.bf16.mxu0 0
        %504 = vmatpush1.bf16.msra.mxu0 0
        %505 = vmatprep.subr.bf16.mxu0 0
        %506 = vmatpush1.bf16.msra.mxu0 0
        %507 = vmatprep.subr.bf16.mxu0 0
        %508 = vmatpush1.bf16.msra.mxu0 0
        %509 = vmatprep.subr.bf16.mxu0 0
        %510 = vmatpush1.bf16.msra.mxu0 0
        %511 = vmatprep.subr.bf16.mxu0 0
        %512 = vmatpush1.bf16.msra.mxu0 0
        %513 = vmatprep.subr.bf16.mxu0 0
        %514 = vmatpush1.bf16.msra.mxu0 0
        %515 = vmatprep.subr.bf16.mxu0 0
        %516 = vmatpush1.bf16.msra.mxu0 0
        %517 = vmatprep.mubr.bf16.mxu0 0
        %518 = vmatmul.mubr.bf16.gmra.mrb[0].mxu0 %v309
        %v519 = vpop.f32.mrb[0].mxu0
        %v520 = vadd.f32 %v260, %v519
        %v521 = vpop.f32.mrb[0].mxu0
        %v522 = vadd.f32 %v264, %v521
        %v523 = vpop.f32.mrb[0].mxu0
        %v524 = vadd.f32 %v260, %v523
        %v525 = vpop.f32.mrb[0].mxu0
        %v526 = vadd.f32 %v264, %v525
        %527 = vmatprep.mubr.bf16.mxu0 0
        %528 = vmatmul.mubr.bf16.gmra.mrb[0].mxu0 %v310
        %v529 = vpop.f32.mrb[0].mxu0
        %v530 = vadd.f32 %v260, %v529
        %v531 = vpop.f32.mrb[0].mxu0
        %v532 = vadd.f32 %v264, %v531
        %v533 = vpop.f32.mrb[0].mxu0
        %v534 = vadd.f32 %v260, %v533
        %v535 = vpop.f32.mrb[0].mxu0
        %v536 = vadd.f32 %v264, %v535
        %537 = vmatprep.mubr.bf16.mxu0 0
        %538 = vmatmul.mubr.bf16.gmra.mrb[0].mxu0 %v311
        %v539 = vpop.f32.mrb[0].mxu0
        %v540 = vadd.f32 %v260, %v539
        %v541 = vpop.f32.mrb[0].mxu0
        %v542 = vadd.f32 %v264, %v541
        %v543 = vpop.f32.mrb[0].mxu0
        %v544 = vadd.f32 %v260, %v543
        %v545 = vpop.f32.mrb[0].mxu0
        %v546 = vadd.f32 %v264, %v545
        %547 = vmatprep.mubr.bf16.mxu0 0
        %548 = vmatmul.mubr.bf16.gmra.mrb[0].mxu0 %v312
        %v549 = vpop.f32.mrb[0].mxu0
        %v550 = vadd.f32 %v260, %v549
        %v551 = vpop.f32.mrb[0].mxu0
        %v552 = vadd.f32 %v264, %v551
        %v553 = vpop.f32.mrb[0].mxu0
        %v554 = vadd.f32 %v260, %v553
        %v555 = vpop.f32.mrb[0].mxu0
        %v556 = vadd.f32 %v264, %v555
        %557 = vmatprep.mubr.bf16.mxu0 0
        %558 = vmatmul.mubr.bf16.gmra.mrb[0].mxu0 %v313
        %v559 = vpop.f32.mrb[0].mxu0
        %v560 = vadd.f32 %v260, %v559
        %v561 = vpop.f32.mrb[0].mxu0
        %v562 = vadd.f32 %v264, %v561
        %v563 = vpop.f32.mrb[0].mxu0
        %v564 = vadd.f32 %v260, %v563
        %v565 = vpop.f32.mrb[0].mxu0
        %v566 = vadd.f32 %v264, %v565
        %567 = vmatprep.mubr.bf16.mxu0 0
        %568 = vmatmul.mubr.bf16.gmra.mrb[0].mxu0 %v314
        %v569 = vpop.f32.mrb[0].mxu0
        %v570 = vadd.f32 %v260, %v569
        %v571 = vpop.f32.mrb[0].mxu0
        %v572 = vadd.f32 %v264, %v571
        %v573 = vpop.f32.mrb[0].mxu0
        %v574 = vadd.f32 %v260, %v573
        %v575 = vpop.f32.mrb[0].mxu0
        %v576 = vadd.f32 %v264, %v575
        %577 = vmatprep.mubr.bf16.mxu0 0
        %578 = vmatmul.mubr.bf16.gmra.mrb[0].mxu0 %v315
        %v579 = vpop.f32.mrb[0].mxu0
        %v580 = vadd.f32 %v260, %v579
        %v581 = vpop.f32.mrb[0].mxu0
        %v582 = vadd.f32 %v264, %v581
        %v583 = vpop.f32.mrb[0].mxu0
        %v584 = vadd.f32 %v260, %v583
        %v585 = vpop.f32.mrb[0].mxu0
        %v586 = vadd.f32 %v264, %v585
        %587 = vmatprep.mubr.bf16.mxu0 0
        %588 = vmatmul.mubr.bf16.gmra.mrb[0].mxu0 %v316
        %v589 = vpop.f32.mrb[0].mxu0
        %v590 = vadd.f32 %v260, %v589
        %v591 = vpop.f32.mrb[0].mxu0
        %v592 = vadd.f32 %v264, %v591
        %v593 = vpop.f32.mrb[0].mxu0
        %v594 = vadd.f32 %v260, %v593
        %v595 = vpop.f32.mrb[0].mxu0
        %v596 = vadd.f32 %v264, %v595
        %597 = vdwg.mxu0
        %598 = vmatprep.subr.bf16.mxu0 %v424
        %599 = vmatpush1.bf16.msra.mxu0 %v423
        %600 = vmatprep.subr.bf16.mxu0 %v428
        %601 = vmatpush1.bf16.msra.mxu0 %v427
        %602 = vmatprep.subr.bf16.mxu0 %v432
        %603 = vmatpush1.bf16.msra.mxu0 %v431
        %604 = vmatprep.subr.bf16.mxu0 %v436
        %605 = vmatpush1.bf16.msra.mxu0 %v435
        %606 = vmatprep.subr.bf16.mxu0 %v440
        %607 = vmatpush1.bf16.msra.mxu0 %v439
        %608 = vmatprep.subr.bf16.mxu0 %v444
        %609 = vmatpush1.bf16.msra.mxu0 %v443
        %610 = vmatprep.subr.bf16.mxu0 %v448
        %611 = vmatpush1.bf16.msra.mxu0 %v447
        %612 = vmatprep.subr.bf16.mxu0 %v452
        %613 = vmatpush1.bf16.msra.mxu0 %v451
        %614 = vmatprep.subr.bf16.mxu0 0
        %615 = vmatpush1.bf16.msra.mxu0 0
        %616 = vmatprep.subr.bf16.mxu0 0
        %617 = vmatpush1.bf16.msra.mxu0 0
        %618 = vmatprep.subr.bf16.mxu0 0
        %619 = vmatpush1.bf16.msra.mxu0 0
        %620 = vmatprep.subr.bf16.mxu0 0
        %621 = vmatpush1.bf16.msra.mxu0 0
        %622 = vmatprep.subr.bf16.mxu0 0
        %623 = vmatpush1.bf16.msra.mxu0 0
        %624 = vmatprep.subr.bf16.mxu0 0
        %625 = vmatpush1.bf16.msra.mxu0 0
        %626 = vmatprep.subr.bf16.mxu0 0
        %627 = vmatpush1.bf16.msra.mxu0 0
        %628 = vmatprep.subr.bf16.mxu0 0
        %629 = vmatpush1.bf16.msra.mxu0 0
        %630 = vmatprep.mubr.bf16.mxu0 0
        %631 = vmatmul.mubr.bf16.gmra.mrb[0].mxu0 %v309
        %v632 = vpop.f32.mrb[0].mxu0
        %v633 = vadd.f32 %v268, %v632
        %v634 = vpop.f32.mrb[0].mxu0
        %v635 = vadd.f32 %v272, %v634
        %v636 = vpop.f32.mrb[0].mxu0
        %v637 = vadd.f32 %v268, %v636
        %v638 = vpop.f32.mrb[0].mxu0
        %v639 = vadd.f32 %v272, %v638
        %640 = vmatprep.mubr.bf16.mxu0 0
        %641 = vmatmul.mubr.bf16.gmra.mrb[0].mxu0 %v310
        %v642 = vpop.f32.mrb[0].mxu0
        %v643 = vadd.f32 %v268, %v642
        %v644 = vpop.f32.mrb[0].mxu0
        %v645 = vadd.f32 %v272, %v644
        %v646 = vpop.f32.mrb[0].mxu0
        %v647 = vadd.f32 %v268, %v646
        %v648 = vpop.f32.mrb[0].mxu0
        %v649 = vadd.f32 %v272, %v648
        %650 = vmatprep.mubr.bf16.mxu0 0
        %651 = vmatmul.mubr.bf16.gmra.mrb[0].mxu0 %v311
        %v652 = vpop.f32.mrb[0].mxu0
        %v653 = vadd.f32 %v268, %v652
        %v654 = vpop.f32.mrb[0].mxu0
        %v655 = vadd.f32 %v272, %v654
        %v656 = vpop.f32.mrb[0].mxu0
        %v657 = vadd.f32 %v268, %v656
        %v658 = vpop.f32.mrb[0].mxu0
        %v659 = vadd.f32 %v272, %v658
        %660 = vmatprep.mubr.bf16.mxu0 0
        %661 = vmatmul.mubr.bf16.gmra.mrb[0].mxu0 %v312
        %v662 = vpop.f32.mrb[0].mxu0
        %v663 = vadd.f32 %v268, %v662
        %v664 = vpop.f32.mrb[0].mxu0
        %v665 = vadd.f32 %v272, %v664
        %v666 = vpop.f32.mrb[0].mxu0
        %v667 = vadd.f32 %v268, %v666
        %v668 = vpop.f32.mrb[0].mxu0
        %v669 = vadd.f32 %v272, %v668
        %670 = vmatprep.mubr.bf16.mxu0 0
        %671 = vmatmul.mubr.bf16.gmra.mrb[0].mxu0 %v313
        %v672 = vpop.f32.mrb[0].mxu0
        %v673 = vadd.f32 %v268, %v672
        %v674 = vpop.f32.mrb[0].mxu0
        %v675 = vadd.f32 %v272, %v674
        %v676 = vpop.f32.mrb[0].mxu0
        %v677 = vadd.f32 %v268, %v676
        %v678 = vpop.f32.mrb[0].mxu0
        %v679 = vadd.f32 %v272, %v678
        %680 = vmatprep.mubr.bf16.mxu0 0
        %681 = vmatmul.mubr.bf16.gmra.mrb[0].mxu0 %v314
        %v682 = vpop.f32.mrb[0].mxu0
        %v683 = vadd.f32 %v268, %v682
        %v684 = vpop.f32.mrb[0].mxu0
        %v685 = vadd.f32 %v272, %v684
        %v686 = vpop.f32.mrb[0].mxu0
        %v687 = vadd.f32 %v268, %v686
        %v688 = vpop.f32.mrb[0].mxu0
        %v689 = vadd.f32 %v272, %v688
        %690 = vmatprep.mubr.bf16.mxu0 0
        %691 = vmatmul.mubr.bf16.gmra.mrb[0].mxu0 %v315
        %v692 = vpop.f32.mrb[0].mxu0
        %v693 = vadd.f32 %v268, %v692
        %v694 = vpop.f32.mrb[0].mxu0
        %v695 = vadd.f32 %v272, %v694
        %v696 = vpop.f32.mrb[0].mxu0
        %v697 = vadd.f32 %v268, %v696
        %v698 = vpop.f32.mrb[0].mxu0
        %v699 = vadd.f32 %v272, %v698
        %700 = vmatprep.mubr.bf16.mxu0 0
        %701 = vmatmul.mubr.bf16.gmra.mrb[0].mxu0 %v316
        %v702 = vpop.f32.mrb[0].mxu0
        %v703 = vadd.f32 %v268, %v702
        %v704 = vpop.f32.mrb[0].mxu0
        %v705 = vadd.f32 %v272, %v704
        %v706 = vpop.f32.mrb[0].mxu0
        %v707 = vadd.f32 %v268, %v706
        %v708 = vpop.f32.mrb[0].mxu0
        %v709 = vadd.f32 %v272, %v708
        %710 = vdwg.mxu0
        %711 = vst [vmem:[%s203] sm:$0xff] %v520
        %712 = vst [vmem:[%s203 + $0x8] sm:$0xff] %v522
        %713 = vst [vmem:[%s203 + $0x10] sm:$0xff] %v633
        %714 = vst [vmem:[%s203 + $0x18] sm:$0xff] %v635
        %715 = vst [vmem:[%s203 + $0x20] sm:$0xff] %v524
        %716 = vst [vmem:[%s203 + $0x28] sm:$0xff] %v526
        %717 = vst [vmem:[%s203 + $0x30] sm:$0xff] %v637
        %718 = vst [vmem:[%s203 + $0x38] sm:$0xff] %v639
        %719 = vst [vmem:[%s203 + $0x40] sm:$0xff] %v530
        %720 = vst [vmem:[%s203 + $0x48] sm:$0xff] %v532
        %721 = vst [vmem:[%s203 + $0x50] sm:$0xff] %v643
        %722 = vst [vmem:[%s203 + $0x58] sm:$0xff] %v645
        %723 = vst [vmem:[%s203 + $0x60] sm:$0xff] %v534
        %724 = vst [vmem:[%s203 + $0x68] sm:$0xff] %v536
        %725 = vst [vmem:[%s203 + $0x70] sm:$0xff] %v647
        %726 = vst [vmem:[%s203 + $0x78] sm:$0xff] %v649
        %727 = vst [vmem:[%s203 + $0x80] sm:$0xff] %v540
        %728 = vst [vmem:[%s203 + $0x88] sm:$0xff] %v542
        %729 = vst [vmem:[%s203 + $0x90] sm:$0xff] %v653
        %730 = vst [vmem:[%s203 + $0x98] sm:$0xff] %v655
        %731 = vst [vmem:[%s203 + $0xa0] sm:$0xff] %v544
        %732 = vst [vmem:[%s203 + $0xa8] sm:$0xff] %v546
        %733 = vst [vmem:[%s203 + $0xb0] sm:$0xff] %v657
        %734 = vst [vmem:[%s203 + $0xb8] sm:$0xff] %v659
        %735 = vst [vmem:[%s203 + $0xc0] sm:$0xff] %v550
        %736 = vst [vmem:[%s203 + $0xc8] sm:$0xff] %v552
        %737 = vst [vmem:[%s203 + $0xd0] sm:$0xff] %v663
        %738 = vst [vmem:[%s203 + $0xd8] sm:$0xff] %v665
        %739 = vst [vmem:[%s203 + $0xe0] sm:$0xff] %v554
        %740 = vst [vmem:[%s203 + $0xe8] sm:$0xff] %v556
        %741 = vst [vmem:[%s203 + $0xf0] sm:$0xff] %v667
        %742 = vst [vmem:[%s203 + $0xf8] sm:$0xff] %v669
        %743 = vst [vmem:[%s203 + $0x100] sm:$0xff] %v560
        %744 = vst [vmem:[%s203 + $0x108] sm:$0xff] %v562
        %745 = vst [vmem:[%s203 + $0x110] sm:$0xff] %v673
        %746 = vst [vmem:[%s203 + $0x118] sm:$0xff] %v675
        %747 = vst [vmem:[%s203 + $0x120] sm:$0xff] %v564
        %748 = vst [vmem:[%s203 + $0x128] sm:$0xff] %v566
        %749 = vst [vmem:[%s203 + $0x130] sm:$0xff] %v677
        %750 = vst [vmem:[%s203 + $0x138] sm:$0xff] %v679
        %751 = vst [vmem:[%s203 + $0x140] sm:$0xff] %v570
        %752 = vst [vmem:[%s203 + $0x148] sm:$0xff] %v572
        %753 = vst [vmem:[%s203 + $0x150] sm:$0xff] %v683
        %754 = vst [vmem:[%s203 + $0x158] sm:$0xff] %v685
        %755 = vst [vmem:[%s203 + $0x160] sm:$0xff] %v574
        %756 = vst [vmem:[%s203 + $0x168] sm:$0xff] %v576
        %757 = vst [vmem:[%s203 + $0x170] sm:$0xff] %v687
        %758 = vst [vmem:[%s203 + $0x178] sm:$0xff] %v689
        %759 = vst [vmem:[%s203 + $0x180] sm:$0xff] %v580
        %760 = vst [vmem:[%s203 + $0x188] sm:$0xff] %v582
        %761 = vst [vmem:[%s203 + $0x190] sm:$0xff] %v693
        %762 = vst [vmem:[%s203 + $0x198] sm:$0xff] %v695
        %763 = vst [vmem:[%s203 + $0x1a0] sm:$0xff] %v584
        %764 = vst [vmem:[%s203 + $0x1a8] sm:$0xff] %v586
        %765 = vst [vmem:[%s203 + $0x1b0] sm:$0xff] %v697
        %766 = vst [vmem:[%s203 + $0x1b8] sm:$0xff] %v699
        %767 = vst [vmem:[%s203 + $0x1c0] sm:$0xff] %v590
        %768 = vst [vmem:[%s203 + $0x1c8] sm:$0xff] %v592
        %769 = vst [vmem:[%s203 + $0x1d0] sm:$0xff] %v703
        %770 = vst [vmem:[%s203 + $0x1d8] sm:$0xff] %v705
        %771 = vst [vmem:[%s203 + $0x1e0] sm:$0xff] %v594
        %772 = vst [vmem:[%s203 + $0x1e8] sm:$0xff] %v596
        %773 = vst [vmem:[%s203 + $0x1f0] sm:$0xff] %v707
        %774 = vst [vmem:[%s203 + $0x1f8] sm:$0xff] %v709
        %s775 = sand.u32 %s97, 1
        %s776 = scalar_lea.sflag [#allocation4], %s775
        %s777 = sand.u32 %s97, 1
        %s778 = smul.addr %s777, 512
        %s779 = scalar_lea.vmem [#allocation7], %s778
        // Predicated region
        $region41: #{tpu_custom_call.1} parent=31 // pred_check
          %p780 = pneg %p107
        $region42: #{tpu_custom_call.1} parent=31 // pred_check_branch
          %782 = sbr.rel (%p780) target = $region44
        $region43: #{tpu_custom_call.1} parent=31 // pred_region
          %s783 = smul.u32 16, %s21
          %s785 = ssub.s32 8192, 8192
          %786 = vsyncadd %s776, %s785
          %s787 = smul.addr %s783, 4
          %s788 = smul.addr %s787, 128
          %s789 = scalar_lea.hbm %s3, %s788
          %s790 = sshll.u32 %s779, 4
          %s791 = int_to_ptr.vmem [resolvable:$true] %s790
          %796 = dma.vmem_to_hbm [thread:$0]  %s791, 8192, %s789, %s776, 512, 512, 32
        $region44: #{tpu_custom_call.1} parent=31 // pred_fallthru
          _
      $region32: #{tpu_custom_call.1} parent=5 // pred_fallthru
        _
      %p797 = scmp.le.s32.totalorder 2, %s16
      // Predicated region
      $region45: #{tpu_custom_call.1} parent=5 // pred_check
        %p798 = pneg %p797
      $region46: #{tpu_custom_call.1} parent=5 // pred_check_branch
        %800 = sbr.rel (%p798) target = $region48
      $region47: #{tpu_custom_call.1} parent=5 // pred_region
        %s801 = ssub.s32 %s16, 2
        // Predicated region
        $region49: #{tpu_custom_call.1} parent=47 // pred_check
          %p802 = pneg %p113
        $region50: #{tpu_custom_call.1} parent=47 // pred_check_branch
          %804 = sbr.rel (%p802) target = $region52
        $region51: #{tpu_custom_call.1} parent=47 // pred_region
          %s805 = sand.u32 %s98, 1
          %s806 = scalar_lea.sflag [#allocation4], %s805
          %s807 = sand.u32 %s98, 1
          %s808 = smul.addr %s807, 512
          %s809 = scalar_lea.vmem [#allocation7], %s808
          %810 = dma.done %s806, 8192
        $region52: #{tpu_custom_call.1} parent=47 // pred_fallthru
          _
      $region48: #{tpu_custom_call.1} parent=5 // pred_fallthru
        _
    $region6: #{tpu_custom_call.1} parent=1 // loop_footer
      %s20 = sadd.s32 1, %s16
    $region7: #{tpu_custom_call.1} parent=1 // loop_footer_branch
      %15 = sbr.rel target = $region3
    $region8: #{tpu_custom_call.1} parent=1 // loop_exit
      _
    %811 = vsyncpa [#allocation3], 1
    %s812 = scalar_lea.sflag [#allocation3], 1
    %813 = vsyncpa %s812, 1
    %814 = vsyncpa [#allocation6], 1
    %815 = vsyncpa [#allocation4], 1
    %s816 = scalar_lea.sflag [#allocation4], 1
    %817 = vsyncpa %s816, 1

</llo_original>
